<compile_context>
chip_gen: v5e
topology: v5e:2x2
jax: 0.10.0
libtpu: 0.0.40
codegen_flags: <defaults>
</compile_context>

<pallas_src>
import functools

import jax
import jax.numpy as jnp
from jax.experimental import pallas as pl
from jax.experimental.pallas import tpu as pltpu


def _relu_sum_kernel(dist_ref, out_ref, *, margin, tb, tc,
                     ragged_b, ragged_c, last_rows, last_cols):
    """Accumulate row-summed relu(margin - d) of one (tb, tc) tile into the
    per-B-tile (1, 1, tc) output block (resident across the inner C loop)."""
    bi = pl.program_id(0)
    cj = pl.program_id(1)

    # New B tile: zero the resident accumulator block (works per-B-tile, so it
    # is safe when the B axis is split across TensorCores).
    @pl.when(cj == 0)
    def _():
        out_ref[...] = jnp.zeros_like(out_ref)

    d = dist_ref[...].astype(jnp.float32)                      # [tb, tc]
    x = jnp.maximum(jnp.float32(margin) - d, jnp.float32(0.0))

    def _accumulate(vals):
        # Sublane reduce (VALU adds + per-lane-tile XLU) -> (1, tc) partial.
        out_ref[...] += jnp.sum(vals, axis=0, keepdims=True)[None]

    if ragged_b or ragged_c:
        conds = []
        if ragged_b:
            conds.append(bi == pl.num_programs(0) - 1)
        if ragged_c:
            conds.append(cj == pl.num_programs(1) - 1)
        is_edge = functools.reduce(jnp.logical_or, conds)

        # Interior tiles: unmasked, cheapest path.
        @pl.when(jnp.logical_not(is_edge))
        def _():
            _accumulate(x)

        # Edge tiles: out-of-bounds lanes of a ragged block hold unspecified
        # data; mask with jnp.where (not arithmetic) so NaN/Inf cannot leak.
        @pl.when(is_edge)
        def _():
            mask = None
            if ragged_b:
                rows = jax.lax.broadcasted_iota(jnp.int32, (tb, tc), 0)
                row_lim = jnp.where(bi == pl.num_programs(0) - 1, last_rows, tb)
                mask = rows < row_lim
            if ragged_c:
                cols = jax.lax.broadcasted_iota(jnp.int32, (tb, tc), 1)
                col_lim = jnp.where(cj == pl.num_programs(1) - 1, last_cols, tc)
                cmask = cols < col_lim
                mask = cmask if mask is None else jnp.logical_and(mask, cmask)
            _accumulate(jnp.where(mask, x, jnp.float32(0.0)))
    else:
        _accumulate(x)


def faim_contrastive_loss(distances, targets, margin: float = 1.0,
                          temperature: float = 0.1,
                          tile_b: int = 512, tile_c: int = 2048):
    """Pallas TPU implementation of FAIMContrastiveLoss.forward.

    Args:
      distances:  [B, C] float array (float32 or bfloat16).
      targets:    [B]    integer class indices in [0, C).
      margin:     contrastive margin.
      temperature: kept for API parity with the PyTorch module (unused in fwd).
      tile_b, tile_c: VMEM tile caps; tile_b must be a multiple of 8 and
        tile_c a multiple of 128.  Defaults give a 4 MiB fp32 distances tile
        (safe on every generation); v6e/v7x may pass tile_c=4096.

    Returns:
      scalar float32 loss.

    Note: out-of-range targets are clamped by take_along_axis (the PyTorch
    gather would raise) -- documented semantic deviation.
    """
    del temperature  # unused by the reference forward pass
    B, C = distances.shape
    assert C >= 2, "need at least 2 classes (negative mean divides by C-1)"
    assert tile_b % 8 == 0 and tile_c % 128 == 0, "tile caps must be (8,128) aligned"

    # --- tile sizes: no padded HBM copy; ragged edges are masked in-kernel --
    tb = B if B <= tile_b else tile_b       # full dim is always a legal block
    tc = C if C <= tile_c else tile_c
    nb = pl.cdiv(B, tb)
    nc = pl.cdiv(C, tc)
    last_rows = B - (nb - 1) * tb
    last_cols = C - (nc - 1) * tc
    ragged_b = last_rows != tb
    ragged_c = last_cols != tc

    kernel = functools.partial(
        _relu_sum_kernel, margin=float(margin), tb=tb, tc=tc,
        ragged_b=ragged_b, ragged_c=ragged_c,
        last_rows=last_rows, last_cols=last_cols)

    itemsize = jnp.dtype(distances.dtype).itemsize
    cost = pl.CostEstimate(
        flops=3 * B * C,
        transcendentals=0,
        bytes_accessed=B * C * itemsize + nb * tc * 4)

    partials = pl.pallas_call(
        kernel,
        out_shape=jax.ShapeDtypeStruct((nb, 1, tc), jnp.float32),
        grid=(nb, nc),                       # C (reduction stream) innermost
        in_specs=[
            # Distances stream: (tb, tc) tile, double-buffered by the Pallas
            # pipeline against the (hidden) VPU work.
            pl.BlockSpec((tb, tc), lambda bi, cj: (bi, cj)),
        ],
        # Per-B-tile lane-wide accumulator: same block for the whole C loop,
        # written back to HBM once per B tile.
        out_specs=pl.BlockSpec((1, 1, tc), lambda bi, cj: (bi, 0, 0)),
        compiler_params=pltpu.CompilerParams(
            # B tiles are independent -> "parallel" lets v7x's two TensorCores
            # split them; C is the reduction stream -> "arbitrary".
            dimension_semantics=("parallel", "arbitrary")),
        cost_estimate=cost,
    )(distances)

    # Grand total of relu(margin - d) over all valid (b, c).
    total_relu = jnp.sum(partials)

    # Positive term: trivial B-element gather, hoisted out of the kernel.
    idx = targets.astype(jnp.int32)[:, None]
    pos = jnp.take_along_axis(distances, idx, axis=1)[:, 0].astype(jnp.float32)
    pos_loss = jnp.mean(pos)
    pos_relu = jnp.sum(jnp.maximum(jnp.float32(margin) - pos, 0.0))
    neg_loss = (total_relu - pos_relu) / jnp.float32(B * (C - 1))
    return pos_loss + neg_loss


def _reference(distances, targets, margin=1.0):
    """Pure-JAX reference (mirrors the PyTorch module)."""
    B, C = distances.shape
    d = distances.astype(jnp.float32)
    pos = jnp.take_along_axis(d, targets[:, None], axis=1)[:, 0]
    mask = jax.nn.one_hot(targets, C, dtype=bool)
    neg_sum = jnp.where(mask, 0.0, jnp.maximum(margin - d, 0.0)).sum()
    return pos.mean() + neg_sum / (B * (C - 1))


if __name__ == "__main__":
    key = jax.random.PRNGKey(0)
    k1, k2, k3, k4 = jax.random.split(key, 4)

    # Case 1: small single-block path (B=8 samples, C=16 classes).
    B, C = 8, 16
    d1 = jax.random.uniform(k1, (B, C), dtype=jnp.float32) * 2.0
    t1 = jax.random.randint(k2, (B,), 0, C, dtype=jnp.int32)
    loss1 = jax.block_until_ready(
        faim_contrastive_loss(d1, t1, margin=1.0, temperature=0.1))
    ref1 = _reference(d1, t1, margin=1.0)
    assert jnp.allclose(loss1, ref1, rtol=1e-5, atol=1e-5), (loss1, ref1)

    # Case 2: tiled + ragged-edge (in-kernel masked) streaming path with tiny
    # tile caps: B=20 -> 3 row tiles (last has 4 valid rows), C=200 -> 2 lane
    # tiles (last has 72 valid columns).  Exercises interior and edge branches.
    B2, C2 = 20, 200
    d2 = jax.random.uniform(k3, (B2, C2), dtype=jnp.float32) * 2.0
    t2 = jax.random.randint(k4, (B2,), 0, C2, dtype=jnp.int32)
    loss2 = jax.block_until_ready(
        faim_contrastive_loss(d2, t2, margin=0.75, tile_b=8, tile_c=128))
    ref2 = _reference(d2, t2, margin=0.75)
    assert jnp.allclose(loss2, ref2, rtol=1e-5, atol=1e-5), (loss2, ref2)

    # Case 3: bfloat16 distances (kernel upcasts per tile, halving HBM traffic).
    d3 = d1.astype(jnp.bfloat16)
    loss3 = jax.block_until_ready(faim_contrastive_loss(d3, t1, margin=1.0))
    ref3 = _reference(d3, t1, margin=1.0)
    assert jnp.allclose(loss3, ref3, rtol=1e-4, atol=1e-4), (loss3, ref3)

    print("KERNEL_OK")
</pallas_src>

<mosaic_0001>
module attributes {stable_mosaic.version = 11 : i64} {
  func.func @_relu_sum_kernel(%arg0: i32, %arg1: i32, %arg2: memref<8x16xf32, #tpu.memory_space<vmem>>, %arg3: memref<1x1x16xf32, #tpu.memory_space<vmem>>) attributes {dimension_semantics = [#tpu.dimension_semantics<parallel>, #tpu.dimension_semantics<arbitrary>], iteration_bounds = array<i64: 1, 1>, scalar_prefetch = 0 : i64, scratch_operands = 0 : i64, tpu.core_type = #tpu.core_type<tc>, window_params = [{transform_indices = @transform_0, window_bounds = array<i64: 8, 16>}, {transform_indices = @transform_1, window_bounds = array<i64: 1, 1, 16>}]} {
    %c0_i32 = arith.constant 0 : i32
    %0 = arith.cmpi eq, %arg1, %c0_i32 : i32
    %1 = arith.extui %0 : i1 to i32
    %c0_i32_0 = arith.constant 0 : i32
    %2 = arith.cmpi ne, %1, %c0_i32_0 : i32
    scf.if %2 {
      %cst_10 = arith.constant 0.000000e+00 : f32
      %14 = vector.broadcast %cst_10 : f32 to vector<1x1x16xf32>
      %c0_11 = arith.constant 0 : index
      %c0_12 = arith.constant 0 : index
      %c0_13 = arith.constant 0 : index
      %15 = vector.load %arg3[%c0_11, %c0_12, %c0_13] : memref<1x1x16xf32, #tpu.memory_space<vmem>>, vector<1x1x16xf32>
      tpu.vector_store %arg3[%c0_11, %c0_12, %c0_13], %14 {strides = array<i32>} : memref<1x1x16xf32, #tpu.memory_space<vmem>>, vector<1x1x16xf32>,
    } else {
    }
    %c0 = arith.constant 0 : index
    %c0_1 = arith.constant 0 : index
    %3 = vector.load %arg2[%c0, %c0_1] : memref<8x16xf32, #tpu.memory_space<vmem>>, vector<8x16xf32>
    %cst = arith.constant 1.000000e+00 : f32
    %4 = vector.broadcast %cst : f32 to vector<8x16xf32>
    %5 = arith.subf %4, %3 : vector<8x16xf32>
    %cst_2 = arith.constant 0.000000e+00 : f32
    %6 = vector.broadcast %cst_2 : f32 to vector<8x16xf32>
    %7 = arith.maximumf %5, %6 : vector<8x16xf32>
    %c0_3 = arith.constant 0 : index
    %c0_4 = arith.constant 0 : index
    %c0_5 = arith.constant 0 : index
    %8 = vector.load %arg3[%c0_3, %c0_4, %c0_5] : memref<1x1x16xf32, #tpu.memory_space<vmem>>, vector<1x1x16xf32>
    %cst_6 = arith.constant dense<0.000000e+00> : vector<16xf32>
    %9 = vector.multi_reduction <add>, %7, %cst_6 [0] : vector<8x16xf32> to vector<16xf32>
    %10 = vector.shape_cast %9 : vector<16xf32> to vector<1x16xf32>
    %11 = vector.shape_cast %10 : vector<1x16xf32> to vector<1x1x16xf32>
    %12 = arith.addf %8, %11 : vector<1x1x16xf32>
    %c0_7 = arith.constant 0 : index
    %c0_8 = arith.constant 0 : index
    %c0_9 = arith.constant 0 : index
    %13 = vector.load %arg3[%c0_7, %c0_8, %c0_9] : memref<1x1x16xf32, #tpu.memory_space<vmem>>, vector<1x1x16xf32>
    tpu.vector_store %arg3[%c0_7, %c0_8, %c0_9], %12 {strides = array<i32>} : memref<1x1x16xf32, #tpu.memory_space<vmem>>, vector<1x1x16xf32>,
    return
  }
  func.func @transform_0(%arg0: i32, %arg1: i32) -> (i32, i32) {
    %c0_i32 = arith.constant 0 : i32
    return %arg0, %arg1 : i32, i32
  }
  func.func @transform_1(%arg0: i32, %arg1: i32) -> (i32, i32, i32) {
    %c0_i32 = arith.constant 0 : i32
    %c0_i32_0 = arith.constant 0 : i32
    %c0_i32_1 = arith.constant 0 : i32
    return %arg0, %c0_i32, %c0_i32_0 : i32, i32, i32
  }
}

</mosaic_0001>

<llo_original>
// kernel: tpu_custom_call.1
$region0: #{tpu_custom_call.1}
  #allocation0 [shape = 'u32[]', space=smem, size = 0x4, offset = 0x4, fixed_abs, tag = 'smem constant byte address 0x4 - core index']
  #allocation1 [shape = 'u32[72,128]{1,0:T(1,128)}', space=vmem, size = 0x9000, scoped, tag = 'internal scratch']
  %s0 = inlined_call_operand.hbm [shape: f32[8,16], index: 0, kind: input, shape index: {}]
  %s1 = inlined_call_operand.hbm [shape: f32[1,1,16], index: 1, kind: output, shape index: {}]
  %s2 = sld [smem:[#allocation0]]
  $region22: #{tpu_custom_call.1} parent=0
    _
  %s4 = ssub.s32 1, %s2
  %s5 = scalar_select 0, %s4, %s2
  $region1: #{tpu_custom_call.1} parent=0
    #allocation2 [shape = 'u8[4096]{0}', space=vmem, size = 0x1000, scoped, tag = 'input window, operand 0, single buffered']
    #allocation3 [shape = 's32[1]{0}', space=sflag, size = 0x4, scoped, tag = 'scoped memory for tpu_custom_call.1']
    #allocation4 [shape = 's32[1]{0}', space=sflag, size = 0x4, scoped, tag = 'scoped memory for tpu_custom_call.1']
    #allocation5 [shape = 'u8[512]{0}', space=vmem, size = 0x400, scoped, tag = 'output window, operand 0, single buffered']
    %6 = vsyncpa [#allocation3], 0
    %7 = vsyncpa [#allocation4], 0
    // Predicated region
    $region2: #{tpu_custom_call.1} parent=1 // pred_check
      _
    $region3: #{tpu_custom_call.1} parent=1 // pred_check_branch
      %9 = sbr.rel (0) target = $region5
    $region4: #{tpu_custom_call.1} parent=1 // pred_region
      %11 = vsyncadd [#allocation3], 0
      %s13 = sshll.u32 %s0, 4
      %s14 = int_to_ptr.hbm [resolvable:$true] %s13
      %s15 = sshll.u32 [#allocation2], 4
      %s16 = int_to_ptr.vmem [resolvable:$true] %s15
      %18 = dma.hbm_to_vmem [thread:$0]  %s14, 128, %s16, [#allocation3]
    $region5: #{tpu_custom_call.1} parent=1 // pred_fallthru
      _
    // Predicated region
    $region6: #{tpu_custom_call.1} parent=1 // pred_check
      _
    $region7: #{tpu_custom_call.1} parent=1 // pred_check_branch
      %20 = sbr.rel (0) target = $region9
    $region8: #{tpu_custom_call.1} parent=1 // pred_region
      %22 = dma.done [#allocation3], 128
    $region9: #{tpu_custom_call.1} parent=1 // pred_fallthru
      _
    %p23 = scmp.eq.s32.totalorder 0, 0
    // Predicated region
    $region10: #{tpu_custom_call.1} parent=1 // pred_check
      %p24 = pneg %p23
    $region11: #{tpu_custom_call.1} parent=1 // pred_check_branch
      %26 = sbr.rel (%p24) target = $region13
    $region12: #{tpu_custom_call.1} parent=1 // pred_region
      %vm27 = vcmask 122880
      %28 = vst.msk [vmem:[#allocation5] sm:$0x1] %vm27, 0.0
    $region13: #{tpu_custom_call.1} parent=1 // pred_fallthru
      _
    %v29 = vld [vmem:[#allocation2] sm:$0xff]
    %v30 = vsub.f32 1.0, %v29
    %v31 = vmax.f32 %v30, 0.0
    %v32 = vld [vmem:[#allocation5] sm:$0x1]
    %vm33 = vcmask 130048
    %v34 = vsel %vm33, %v31, 0.0
    %v35 = vrot.slane %v34, 4
    %v36 = vadd.f32 %v34, %v35
    %v37 = vrot.slane %v36, 2
    %v38 = vadd.f32 %v36, %v37
    %v39 = vrot.slane %v38, 1
    %v40 = vadd.f32 %v38, %v39
    %v41 = vadd.f32 %v32, %v40
    %vm42 = vcmask 122880
    %43 = vst.msk [vmem:[#allocation5] sm:$0x1] %vm42, %v41
    // Predicated region
    $region14: #{tpu_custom_call.1} parent=1 // pred_check
      _
    $region15: #{tpu_custom_call.1} parent=1 // pred_check_branch
      %45 = sbr.rel (0) target = $region17
    $region16: #{tpu_custom_call.1} parent=1 // pred_region
      %47 = vsyncadd [#allocation4], 0
      %s49 = sshll.u32 [#allocation5], 4
      %s50 = int_to_ptr.vmem [resolvable:$true] %s49
      %s51 = sshll.u32 %s1, 4
      %s52 = int_to_ptr.hbm [resolvable:$true] %s51
      %54 = dma.vmem_to_hbm [thread:$0]  %s50, 16, %s52, [#allocation4]
    $region17: #{tpu_custom_call.1} parent=1 // pred_fallthru
      _
    // Predicated region
    $region18: #{tpu_custom_call.1} parent=1 // pred_check
      _
    $region19: #{tpu_custom_call.1} parent=1 // pred_check_branch
      %56 = sbr.rel (0) target = $region21
    $region20: #{tpu_custom_call.1} parent=1 // pred_region
      %58 = dma.done [#allocation4], 16
    $region21: #{tpu_custom_call.1} parent=1 // pred_fallthru
      _
    %59 = vsyncpa [#allocation3], 1
    %60 = vsyncpa [#allocation4], 1

</llo_original>
